<compile_context>
chip_gen: v7x
topology: tpu7x:2x2x1
jax: 0.10.0
libtpu: 0.0.40
codegen_flags: <defaults>
</compile_context>

<pallas_src>
import jax
import jax.numpy as jnp
from jax.experimental import pallas as pl
from jax.experimental.pallas import tpu as pltpu


def _mlp_kernel(x_ref, w1_ref, b1_ref, w2_ref, b2_ref, o_ref):
    # fc1: [TM, F](bf16) @ [F, H](bf16) -> f32 accumulation on the MXU.
    h = jnp.dot(x_ref[...], w1_ref[...], preferred_element_type=jnp.float32)
    # Bias + tanh in f32 (VPU/EUP).
    h = jnp.tanh(h + b1_ref[...])
    # fc2 as an elementwise multiply + lane reduction (avoids an N=1 MXU pass):
    #   y[m] = sum_h h[m, h] * w2_row[0, h] + b2
    y = jnp.sum(h * w2_ref[...], axis=-1, keepdims=True)
    o_ref[...] = y + b2_ref[0]  # b2 is an SMEM scalar


def net_forward(x, w1, b1, w2, b2, *, block_m=512):
    """Pallas equivalent of Net.forward: tanh(x @ w1 + b1) @ w2 + b2.

    x : [B, F] float32          (converted to bf16 for the MXU)
    w1: [F, H] float32          (converted to bf16 for the MXU)
    b1: [1, H] float32
    w2: [H, 1] float32          (reshaped to a [1, H] row for the lane reduce)
    b2: [1, 1] float32          (placed in SMEM as a scalar)
    """
    B, F = x.shape
    H = w1.shape[1]
    assert w1.shape == (F, H) and b1.shape == (1, H)
    assert w2.shape == (H, 1) and b2.shape == (1, 1)

    # bf16 MXU inputs, f32 accumulation (v6e/v7x full-rate; fine on v5e too).
    x_bf16 = x.astype(jnp.bfloat16)
    w1_bf16 = w1.astype(jnp.bfloat16)
    # w2 as a lane-aligned [1, H] f32 row; b2 as an SMEM scalar.
    w2_row = jnp.reshape(w2, (1, H)).astype(jnp.float32)
    b2_scalar = jnp.reshape(b2, (1,)).astype(jnp.float32)

    # Batch tile: full batch if small, otherwise a multiple-of-8 tile that is
    # comfortably within v7x's 32 MiB scoped VMEM even when double-buffered.
    tm = B if B <= block_m else block_m
    grid = (pl.cdiv(B, tm),)

    return pl.pallas_call(
        _mlp_kernel,
        out_shape=jax.ShapeDtypeStruct((B, 1), jnp.float32),
        grid=grid,
        in_specs=[
            pl.BlockSpec((tm, F), lambda i: (i, 0)),        # x tile (pipelined)
            pl.BlockSpec((F, H), lambda i: (0, 0)),         # w1 (resident)
            pl.BlockSpec((1, H), lambda i: (0, 0)),         # b1 (resident)
            pl.BlockSpec((1, H), lambda i: (0, 0)),         # w2 row (resident)
            pl.BlockSpec(memory_space=pltpu.MemorySpace.SMEM),  # b2 scalar
        ],
        out_specs=pl.BlockSpec((tm, 1), lambda i: (i, 0)),
        compiler_params=pltpu.CompilerParams(
            dimension_semantics=("parallel",),
        ),
    )(x_bf16, w1_bf16, b1, w2_row, b2_scalar)
    # TODO(synk): for very large B, stage a lane-dense ([1, B]-shaped) output
    # instead of last-dim-1 stores to avoid masked vst penalties.


def _init_params(key, in_features, hidden=128):
    # Deterministic init mimicking nn.Linear's uniform(-1/sqrt(fan_in), 1/sqrt(fan_in)).
    k1, k2, k3, k4 = jax.random.split(key, 4)
    bound1 = 1.0 / jnp.sqrt(jnp.float32(in_features))
    bound2 = 1.0 / jnp.sqrt(jnp.float32(hidden))
    w1 = jax.random.uniform(k1, (in_features, hidden), jnp.float32, -bound1, bound1)
    b1 = jax.random.uniform(k2, (1, hidden), jnp.float32, -bound1, bound1)
    w2 = jax.random.uniform(k3, (hidden, 1), jnp.float32, -bound2, bound2)
    b2 = jax.random.uniform(k4, (1, 1), jnp.float32, -bound2, bound2)
    return w1, b1, w2, b2


if __name__ == "__main__":
    key = jax.random.PRNGKey(0)
    k_x, k_p = jax.random.split(key)

    B, F = 8, 32          # batch, input features (X_train_t.shape[1] analogue)
    HIDDEN = 128

    x = jax.random.normal(k_x, (B, F), jnp.float32)
    w1, b1, w2, b2 = _init_params(k_p, F, HIDDEN)

    out = net_forward(x, w1, b1, w2, b2)
    out = jax.block_until_ready(out)

    # Reference consistent with the kernel's bf16 MXU inputs (f32 elsewhere).
    x_r = x.astype(jnp.bfloat16).astype(jnp.float32)
    w1_r = w1.astype(jnp.bfloat16).astype(jnp.float32)
    ref = jnp.tanh(x_r @ w1_r + b1) @ w2 + b2

    assert out.shape == (B, 1)
    assert jnp.allclose(out, ref, atol=1e-3, rtol=1e-3)

    print("KERNEL_OK")
</pallas_src>

<mosaic_0001>
module attributes {stable_mosaic.version = 11 : i64} {
  func.func @_mlp_kernel(%arg0: i32, %arg1: memref<8x32xbf16, #tpu.memory_space<vmem>>, %arg2: memref<32x128xbf16, #tpu.memory_space<vmem>>, %arg3: memref<1x128xf32, #tpu.memory_space<vmem>>, %arg4: memref<1x128xf32, #tpu.memory_space<vmem>>, %arg5: memref<1xf32, #tpu.memory_space<smem>>, %arg6: memref<8x1xf32, #tpu.memory_space<vmem>>) attributes {dimension_semantics = [#tpu.dimension_semantics<parallel>], iteration_bounds = array<i64: 1>, scalar_prefetch = 0 : i64, scratch_operands = 0 : i64, tpu.core_type = #tpu.core_type<tc>, window_params = [{transform_indices = @transform_0, window_bounds = array<i64: 8, 32>}, {pipeline_mode = #tpu.pipeline_mode<synchronous>, transform_indices = @transform_1, window_bounds = array<i64: 32, 128>}, {pipeline_mode = #tpu.pipeline_mode<synchronous>, transform_indices = @transform_2, window_bounds = array<i64: 1, 128>}, {pipeline_mode = #tpu.pipeline_mode<synchronous>, transform_indices = @transform_3, window_bounds = array<i64: 1, 128>}, {transform_indices = @transform_4, window_bounds = array<i64: 1>}, {transform_indices = @transform_5, window_bounds = array<i64: 8, 1>}]} {
    %c0 = arith.constant 0 : index
    %c0_0 = arith.constant 0 : index
    %0 = vector.load %arg1[%c0, %c0_0] : memref<8x32xbf16, #tpu.memory_space<vmem>>, vector<8x32xbf16>
    %c0_1 = arith.constant 0 : index
    %c0_2 = arith.constant 0 : index
    %1 = vector.load %arg2[%c0_1, %c0_2] : memref<32x128xbf16, #tpu.memory_space<vmem>>, vector<32x128xbf16>
    %cst = arith.constant dense<0.000000e+00> : vector<8x128xf32>
    %2 = tpu.matmul %0, %1, %cst {dimension_numbers = #tpu.dot_dimension_numbers<[1], [0], [0], [1], [0, 0, 1, 1], [], []>} : vector<8x32xbf16>, vector<32x128xbf16>, vector<8x128xf32> -> vector<8x128xf32>
    %c0_3 = arith.constant 0 : index
    %c0_4 = arith.constant 0 : index
    %3 = vector.load %arg3[%c0_3, %c0_4] : memref<1x128xf32, #tpu.memory_space<vmem>>, vector<1x128xf32>
    %4 = vector.broadcast %3 : vector<1x128xf32> to vector<8x128xf32>
    %5 = arith.addf %2, %4 : vector<8x128xf32>
    %6 = math.tanh %5 : vector<8x128xf32>
    %c0_5 = arith.constant 0 : index
    %c0_6 = arith.constant 0 : index
    %7 = vector.load %arg4[%c0_5, %c0_6] : memref<1x128xf32, #tpu.memory_space<vmem>>, vector<1x128xf32>
    %8 = vector.broadcast %7 : vector<1x128xf32> to vector<8x128xf32>
    %9 = arith.mulf %6, %8 : vector<8x128xf32>
    %cst_7 = arith.constant dense<0.000000e+00> : vector<8xf32>
    %10 = vector.multi_reduction <add>, %9, %cst_7 [1] : vector<8x128xf32> to vector<8xf32>
    %11 = vector.shape_cast %10 : vector<8xf32> to vector<8x1xf32>
    %c0_8 = arith.constant 0 : index
    %12 = memref.load %arg5[%c0_8] : memref<1xf32, #tpu.memory_space<smem>>
    %13 = vector.broadcast %12 : f32 to vector<8x1xf32>
    %14 = arith.addf %11, %13 : vector<8x1xf32>
    %c0_9 = arith.constant 0 : index
    %c0_10 = arith.constant 0 : index
    %15 = vector.load %arg6[%c0_9, %c0_10] : memref<8x1xf32, #tpu.memory_space<vmem>>, vector<8x1xf32>
    tpu.vector_store %arg6[%c0_9, %c0_10], %14 {strides = array<i32>} : memref<8x1xf32, #tpu.memory_space<vmem>>, vector<8x1xf32>,
    return
  }
  func.func @transform_0(%arg0: i32) -> (i32, i32) {
    %c0_i32 = arith.constant 0 : i32
    %c0_i32_0 = arith.constant 0 : i32
    return %arg0, %c0_i32 : i32, i32
  }
  func.func @transform_1(%arg0: i32) -> (i32, i32) {
    %c0_i32 = arith.constant 0 : i32
    %c0_i32_0 = arith.constant 0 : i32
    %c0_i32_1 = arith.constant 0 : i32
    return %c0_i32, %c0_i32_0 : i32, i32
  }
  func.func @transform_2(%arg0: i32) -> (i32, i32) {
    %c0_i32 = arith.constant 0 : i32
    %c0_i32_0 = arith.constant 0 : i32
    %c0_i32_1 = arith.constant 0 : i32
    return %c0_i32, %c0_i32_0 : i32, i32
  }
  func.func @transform_3(%arg0: i32) -> (i32, i32) {
    %c0_i32 = arith.constant 0 : i32
    %c0_i32_0 = arith.constant 0 : i32
    %c0_i32_1 = arith.constant 0 : i32
    return %c0_i32, %c0_i32_0 : i32, i32
  }
  func.func @transform_4(%arg0: i32) -> i32 {
    %c0_i32 = arith.constant 0 : i32
    %c0_i32_0 = arith.constant 0 : i32
    return %c0_i32 : i32
  }
  func.func @transform_5(%arg0: i32) -> (i32, i32) {
    %c0_i32 = arith.constant 0 : i32
    %c0_i32_0 = arith.constant 0 : i32
    return %arg0, %c0_i32 : i32, i32
  }
}

</mosaic_0001>

<llo_original>
// kernel: tpu_custom_call.1
$region0: #{tpu_custom_call.1}
  #allocation0 [shape = 'u32[]', space=smem, size = 0x4, offset = 0x4, fixed_abs, tag = 'smem constant byte address 0x4 - core index']
  #allocation1 [shape = 'u32[144,128]{1,0:T(1,128)}', space=vmem, size = 0x12000, scoped, tag = 'internal scratch']
  #allocation2 [shape = 'f32[1]{0:T(128)S(6)}', space=smem, size = 0x200, scoped, tag = 'scoped memory for tpu_custom_call.1']
  %s0 = inlined_call_operand.hbm [shape: bf16[8,32], index: 0, kind: input, shape index: {}]
  %s1 = inlined_call_operand.hbm [shape: bf16[32,128], index: 1, kind: input, shape index: {}]
  %s2 = inlined_call_operand.vmem [shape: f32[1,128], index: 2, kind: input, shape index: {}]
  %s3 = inlined_call_operand.vmem [shape: f32[1,128], index: 3, kind: input, shape index: {}]
  %s4 = inlined_call_operand.<no memory space> [shape: f32[1], index: 4, kind: input, shape index: {}]
  %s5 = inlined_call_operand.vmem [shape: f32[8,1], index: 5, kind: output, shape index: {}]
  %s6 = sld [smem:[#allocation0]]
  $region38: #{tpu_custom_call.1} parent=0
    _
  %s8 = ssub.s32 1, %s6
  %s9 = scalar_select 0, %s8, %s6
  %10 = sst [smem:[#allocation2]] %s4
  $region1: #{tpu_custom_call.1} parent=0
    #allocation3 [shape = 'u8[2048]{0}', space=vmem, size = 0x800, scoped, tag = 'input window, operand 0, single buffered']
    #allocation4 [shape = 's32[1]{0}', space=sflag, size = 0x4, scoped, tag = 'scoped memory for tpu_custom_call.1']
    #allocation5 [shape = 'u8[8192]{0}', space=vmem, size = 0x2000, scoped, tag = 'input window, operand 1, single buffered']
    #allocation6 [shape = 's32[1]{0}', space=sflag, size = 0x4, scoped, tag = 'scoped memory for tpu_custom_call.1']
    %11 = vsyncpa [#allocation4], 0
    %12 = vsyncpa [#allocation6], 0
    // Predicated region
    $region2: #{tpu_custom_call.1} parent=1 // pred_check
      _
    $region3: #{tpu_custom_call.1} parent=1 // pred_check_branch
      %14 = sbr.rel (0) target = $region5
    $region4: #{tpu_custom_call.1} parent=1 // pred_region
      %s16 = ssub.s32 64, 64
      %17 = vsyncadd [#allocation4], %s16
      %s19 = sshll.u32 [#allocation3], 4
      %s20 = int_to_ptr.vmem [resolvable:$true] %s19
      %22 = dma.hbm_to_vmem [thread:$0]  %s0, 64, %s20, [#allocation4]
    $region5: #{tpu_custom_call.1} parent=1 // pred_fallthru
      _
    // Predicated region
    $region6: #{tpu_custom_call.1} parent=1 // pred_check
      _
    $region7: #{tpu_custom_call.1} parent=1 // pred_check_branch
      %24 = sbr.rel (0) target = $region9
    $region8: #{tpu_custom_call.1} parent=1 // pred_region
      %s26 = ssub.s32 256, 256
      %27 = vsyncadd [#allocation6], %s26
      %s28 = sshll.u32 [#allocation5], 4
      %s29 = int_to_ptr.vmem [resolvable:$true] %s28
      %34 = dma.hbm_to_vmem [thread:$0]  %s1, 256, %s29, [#allocation6], 64, 64, 4
    $region9: #{tpu_custom_call.1} parent=1 // pred_fallthru
      _
    // Predicated region
    $region10: #{tpu_custom_call.1} parent=1 // pred_check
      _
    $region11: #{tpu_custom_call.1} parent=1 // pred_check_branch
      %36 = sbr.rel (0) target = $region13
    $region12: #{tpu_custom_call.1} parent=1 // pred_region
      _
    $region13: #{tpu_custom_call.1} parent=1 // pred_fallthru
      _
    // Predicated region
    $region14: #{tpu_custom_call.1} parent=1 // pred_check
      _
    $region15: #{tpu_custom_call.1} parent=1 // pred_check_branch
      %38 = sbr.rel (0) target = $region17
    $region16: #{tpu_custom_call.1} parent=1 // pred_region
      _
    $region17: #{tpu_custom_call.1} parent=1 // pred_fallthru
      _
    // Predicated region
    $region18: #{tpu_custom_call.1} parent=1 // pred_check
      _
    $region19: #{tpu_custom_call.1} parent=1 // pred_check_branch
      %40 = sbr.rel (0) target = $region21
    $region20: #{tpu_custom_call.1} parent=1 // pred_region
      _
    $region21: #{tpu_custom_call.1} parent=1 // pred_fallthru
      _
    // Predicated region
    $region22: #{tpu_custom_call.1} parent=1 // pred_check
      _
    $region23: #{tpu_custom_call.1} parent=1 // pred_check_branch
      %42 = sbr.rel (0) target = $region25
    $region24: #{tpu_custom_call.1} parent=1 // pred_region
      %43 = dma.done [#allocation4], 64
    $region25: #{tpu_custom_call.1} parent=1 // pred_fallthru
      _
    // Predicated region
    $region26: #{tpu_custom_call.1} parent=1 // pred_check
      _
    $region27: #{tpu_custom_call.1} parent=1 // pred_check_branch
      %45 = sbr.rel (0) target = $region29
    $region28: #{tpu_custom_call.1} parent=1 // pred_region
      %46 = dma.done [#allocation6], 256
    $region29: #{tpu_custom_call.1} parent=1 // pred_fallthru
      _
    %v48 = vld [vmem:[#allocation3] sm:$0xf]
    %v49 = vld [vmem:[#allocation5] sm:$0xf]
    %v50 = vld [vmem:[#allocation5 + $0x4] sm:$0xf]
    %v51 = vld [vmem:[#allocation5 + $0x8] sm:$0xf]
    %v52 = vld [vmem:[#allocation5 + $0xc] sm:$0xf]
    %v53 = vld [vmem:[%s2] sm:$0x1]
    %v55 = vlaneseq
    %v56 = vshrl.u32 %v55, 7
    %v57 = vsub.s32 0, %v56
    %v58 = vrot.slane %v53, %v57
    %v64 = vunpack.c.l.b16 %v49
    %v65 = vunpack.c.l.b16 %v50
    %v66 = vunpack.c.l.b16 %v51
    %v67 = vunpack.c.l.b16 %v52
    %v68 = vpack.c.b16 %v65, %v64
    %v69 = vpack.c.b16 %v67, %v66
    %vm72 = vcmask 261120
    %v74 = vsel %vm72, %v48, 0
    %76 = vmatprep.subr.bf16.mxu0 0
    %77 = vmatpush1.bf16.msra.mxu0 %v68
    %78 = vmatprep.subr.bf16.mxu0 0
    %79 = vmatpush1.bf16.msra.mxu0 %v69
    %80 = vmatprep.subr.bf16.mxu0 0
    %81 = vmatpush1.bf16.msra.mxu0 0
    %82 = vmatprep.subr.bf16.mxu0 0
    %83 = vmatpush1.bf16.msra.mxu0 0
    %84 = vmatprep.subr.bf16.mxu0 0
    %85 = vmatpush1.bf16.msra.mxu0 0
    %86 = vmatprep.subr.bf16.mxu0 0
    %87 = vmatpush1.bf16.msra.mxu0 0
    %88 = vmatprep.subr.bf16.mxu0 0
    %89 = vmatpush1.bf16.msra.mxu0 0
    %90 = vmatprep.subr.bf16.mxu0 0
    %91 = vmatpush1.bf16.msra.mxu0 0
    %92 = vmatprep.subr.bf16.mxu0 0
    %93 = vmatpush1.bf16.msra.mxu0 0
    %94 = vmatprep.subr.bf16.mxu0 0
    %95 = vmatpush1.bf16.msra.mxu0 0
    %96 = vmatprep.subr.bf16.mxu0 0
    %97 = vmatpush1.bf16.msra.mxu0 0
    %98 = vmatprep.subr.bf16.mxu0 0
    %99 = vmatpush1.bf16.msra.mxu0 0
    %100 = vmatprep.subr.bf16.mxu0 0
    %101 = vmatpush1.bf16.msra.mxu0 0
    %102 = vmatprep.subr.bf16.mxu0 0
    %103 = vmatpush1.bf16.msra.mxu0 0
    %104 = vmatprep.subr.bf16.mxu0 0
    %105 = vmatpush1.bf16.msra.mxu0 0
    %106 = vmatprep.subr.bf16.mxu0 0
    %107 = vmatpush1.bf16.msra.mxu0 0
    %108 = vmatprep.mubr.bf16.mxu0 0
    %109 = vmatmul.mubr.bf16.gmra.mrb[0].mxu0 %v74
    %v110 = vpop.f32.mrb[0].mxu0
    %v111 = vadd.f32 %v58, %v110
    %v112 = vpop.f32.mrb[0].mxu0
    %v113 = vpop.f32.mrb[0].mxu0
    %v114 = vpop.f32.mrb[0].mxu0
    %115 = vdwg.mxu0
    %v116 = vtanh.pop %v111
    %v117 = vld [vmem:[%s3] sm:$0x1]
    %v119 = vlaneseq
    %v120 = vshrl.u32 %v119, 7
    %v121 = vsub.s32 0, %v120
    %v122 = vrot.slane %v117, %v121
    %v124 = vmul.f32 %v116, %v122
    %125 = vadd.xlane.f32.xlu0 %v124
    %v126 = vpop.xlane.xlu0 %125
    %s127 = sld [smem:[#allocation2]]
    %v128 = vstv %s127
    %v129 = vadd.f32 %v126, %v128
    %vm130 = vcmask 7168
    %131 = vst.msk [vmem:[%s5] sm:$0xff] %vm130, %v129
    // Predicated region
    $region30: #{tpu_custom_call.1} parent=1 // pred_check
      _
    $region31: #{tpu_custom_call.1} parent=1 // pred_check_branch
      %133 = sbr.rel (0) target = $region33
    $region32: #{tpu_custom_call.1} parent=1 // pred_region
      _
    $region33: #{tpu_custom_call.1} parent=1 // pred_fallthru
      _
    // Predicated region
    $region34: #{tpu_custom_call.1} parent=1 // pred_check
      _
    $region35: #{tpu_custom_call.1} parent=1 // pred_check_branch
      %135 = sbr.rel (0) target = $region37
    $region36: #{tpu_custom_call.1} parent=1 // pred_region
      _
    $region37: #{tpu_custom_call.1} parent=1 // pred_fallthru
      _
    %136 = vsyncpa [#allocation4], 1
    %137 = vsyncpa [#allocation6], 1

</llo_original>
